<compile_context>
chip_gen: v7x
topology: tpu7x:2x2x1
jax: 0.10.0
libtpu: 0.0.40
codegen_flags: <defaults>
</compile_context>

<pallas_src>
import functools

import jax
import jax.numpy as jnp
from jax import lax
from jax.experimental import pallas as pl
from jax.experimental.pallas import tpu as pltpu

TILE_C = 128        # lane width (last dim stays lane-dense)
MAX_TILE_R = 8192   # sublanes per grid block -> (8192,128) f32 = 4 MiB / input / block
CHUNK_R = 512       # rows per inner-loop chunk (bounds live VMEM temporaries)


def _round_up(n, m):
    return ((n + m - 1) // m) * m


def _focal_kernel(x_ref, t_ref, o_ref, *, gamma, tile_r, chunk_r,
                  n_valid_rows, needs_mask):
    blk_row0 = pl.program_id(0) * tile_r
    n_chunks = tile_r // chunk_r

    def chunk_partial(c):
        if isinstance(c, int):
            start = c * chunk_r
        else:
            start = pl.multiple_of(c * chunk_r, chunk_r)

        x = x_ref[pl.ds(start, chunk_r), :].astype(jnp.float32)
        t = t_ref[pl.ds(start, chunk_r), :].astype(jnp.float32)

        if needs_mask:
            # Mask invalid rows BEFORE any transcendental so stale/garbage VMEM
            # lanes in the ragged last block never reach exp/log.
            rid = (blk_row0 + start
                   + lax.broadcasted_iota(jnp.int32, (chunk_r, TILE_C), 0))
            valid = rid < n_valid_rows
            x = jnp.where(valid, x, -100.0)   # x=-100, t=0 -> exactly zero loss
            t = jnp.where(valid, t, 0.0)

        # log_pt = t*log(sigmoid(x)) + (1-t)*log(1-sigmoid(x)) = t*x - softplus(x)
        softplus = jnp.maximum(x, 0.0) + jnp.log1p(jnp.exp(-jnp.abs(x)))
        log_pt = t * x - softplus
        pt = jnp.exp(log_pt)
        om = jnp.maximum(1.0 - pt, 0.0)       # clamp guards pow/NaN at saturation

        g = float(gamma)
        if g == 0.0:
            w = jnp.ones_like(om)
        elif g.is_integer() and 1.0 <= g <= 4.0:
            w = om
            for _ in range(int(g) - 1):       # VPU multiplies, no EUP pow
                w = w * om
        else:
            w = om ** g                       # generic non-integer gamma

        contrib = w * log_pt                  # (-alpha) applied to the scalar outside
        # Fold chunk into one (8,128) slab of partial sums (pure VPU adds).
        return contrib.reshape(-1, 8, TILE_C).sum(axis=0)

    if n_chunks == 1:
        acc = chunk_partial(0)
    else:
        acc = lax.fori_loop(
            0, n_chunks,
            lambda c, a: a + chunk_partial(c),
            jnp.zeros((8, TILE_C), jnp.float32))

    o_ref[...] = acc[None, :, :]


def focal_with_logits_first(logits, target, *, alpha=1.0, gamma=2.0):
    """Pallas equivalent of FocalWithLogitsFirst(alpha, gamma)(logits, target)."""
    assert logits.shape == target.shape
    n_elem = logits.size

    # Keep native dtypes in HBM (bf16 logits / int targets halve read traffic);
    # the f32 upcast happens inside the kernel. ravel of a contiguous array is free.
    x = jnp.ravel(logits)
    t = jnp.ravel(target)

    # Lane alignment only: pad at most 127 elements (rare case n_elem % 128 != 0)
    # with zero-loss values. No full-block padding -- ragged rows are masked in-kernel.
    n_lane = _round_up(n_elem, TILE_C)
    if n_lane != n_elem:
        x = jnp.pad(x, (0, n_lane - n_elem), constant_values=-100.0)
        t = jnp.pad(t, (0, n_lane - n_elem), constant_values=0)
    n_rows = n_lane // TILE_C

    # Block rows: multiple of CHUNK_R when large (chunks tile exactly), else a
    # multiple of 8; capped at MAX_TILE_R. Last (partial) block handled by masking.
    if n_rows <= CHUNK_R:
        tile_r = _round_up(n_rows, 8)
        chunk_r = tile_r
    else:
        tile_r = min(MAX_TILE_R, _round_up(n_rows, CHUNK_R))
        chunk_r = CHUNK_R
    num_blocks = (n_rows + tile_r - 1) // tile_r
    needs_mask = (num_blocks * tile_r) != n_rows

    x2d = x.reshape(n_rows, TILE_C)
    t2d = t.reshape(n_rows, TILE_C)

    kernel = functools.partial(
        _focal_kernel, gamma=float(gamma), tile_r=tile_r, chunk_r=chunk_r,
        n_valid_rows=n_rows, needs_mask=needs_mask)

    partials = pl.pallas_call(
        kernel,
        out_shape=jax.ShapeDtypeStruct((num_blocks, 8, TILE_C), jnp.float32),
        grid_spec=pltpu.PrefetchScalarGridSpec(
            num_scalar_prefetch=0,
            grid=(num_blocks,),
            in_specs=[
                pl.BlockSpec((tile_r, TILE_C), lambda i: (i, 0)),
                pl.BlockSpec((tile_r, TILE_C), lambda i: (i, 0)),
            ],
            out_specs=pl.BlockSpec((1, 8, TILE_C), lambda i: (i, 0, 0)),
        ),
        compiler_params=pltpu.CompilerParams(
            dimension_semantics=("parallel",),
            vmem_limit_bytes=40 * 1024 * 1024,
        ),
    )(x2d, t2d)

    # Tiny final reduction + mean in plain JAX; alpha and -1 applied here (scalar).
    total = jnp.sum(partials)
    return (-float(alpha)) * total / jnp.float32(n_elem)


def _focal_ref(logits, target, alpha=1.0, gamma=2.0, eps=1e-12):
    """Pure-JAX reference mirroring the PyTorch module (eps-guarded logs)."""
    probs = jax.nn.sigmoid(logits.astype(jnp.float32))
    t = target.astype(jnp.float32)
    log_pt = t * jnp.log(probs + eps) + (1.0 - t) * jnp.log(1.0 - probs + eps)
    pt = jnp.exp(log_pt)
    focal = -1.0 * (alpha * (1.0 - pt) ** gamma) * log_pt
    return jnp.mean(focal)


if __name__ == "__main__":
    key = jax.random.PRNGKey(0)
    k1, k2 = jax.random.split(key)

    # Small NCHW-like shape: batch=2, channels=4, spatial=16x16.
    shape = (2, 4, 16, 16)
    logits = jax.random.normal(k1, shape, dtype=jnp.float32) * 2.0
    target = (jax.random.uniform(k2, shape) > 0.5).astype(jnp.float32)

    loss = focal_with_logits_first(logits, target, alpha=1.0, gamma=2.0)
    loss = jax.block_until_ready(loss)

    ref = _focal_ref(logits, target)
    assert jnp.allclose(loss, ref, rtol=1e-4, atol=1e-6), (loss, ref)

    print("KERNEL_OK")
</pallas_src>

<mosaic_0001>
module attributes {stable_mosaic.version = 11 : i64} {
  func.func @_focal_kernel(%arg0: i32, %arg1: memref<16x128xf32, #tpu.memory_space<vmem>>, %arg2: memref<16x128xf32, #tpu.memory_space<vmem>>, %arg3: memref<1x8x128xf32, #tpu.memory_space<vmem>>) attributes {dimension_semantics = [#tpu.dimension_semantics<parallel>], iteration_bounds = array<i64: 1>, scalar_prefetch = 0 : i64, scratch_operands = 0 : i64, tpu.core_type = #tpu.core_type<tc>, window_params = [{transform_indices = @transform_0, window_bounds = array<i64: 16, 128>}, {transform_indices = @transform_1, window_bounds = array<i64: 16, 128>}, {transform_indices = @transform_2, window_bounds = array<i64: 1, 8, 128>}]} {
    %c0 = arith.constant 0 : index
    %c0_0 = arith.constant 0 : index
    %0 = vector.load %arg1[%c0, %c0_0] : memref<16x128xf32, #tpu.memory_space<vmem>>, vector<16x128xf32>
    %c0_1 = arith.constant 0 : index
    %c0_2 = arith.constant 0 : index
    %1 = vector.load %arg2[%c0_1, %c0_2] : memref<16x128xf32, #tpu.memory_space<vmem>>, vector<16x128xf32>
    %cst = arith.constant 0.000000e+00 : f32
    %2 = vector.broadcast %cst : f32 to vector<16x128xf32>
    %3 = arith.maximumf %0, %2 : vector<16x128xf32>
    %4 = math.absf %0 : vector<16x128xf32>
    %cst_3 = arith.constant 0.000000e+00 : f32
    %5 = vector.broadcast %cst_3 : f32 to vector<16x128xf32>
    %6 = arith.subf %5, %4 : vector<16x128xf32>
    %7 = math.exp %6 : vector<16x128xf32>
    %8 = math.log1p %7 : vector<16x128xf32>
    %9 = arith.addf %3, %8 : vector<16x128xf32>
    %10 = arith.mulf %1, %0 : vector<16x128xf32>
    %11 = arith.subf %10, %9 : vector<16x128xf32>
    %12 = math.exp %11 : vector<16x128xf32>
    %cst_4 = arith.constant 1.000000e+00 : f32
    %13 = vector.broadcast %cst_4 : f32 to vector<16x128xf32>
    %14 = arith.subf %13, %12 : vector<16x128xf32>
    %cst_5 = arith.constant 0.000000e+00 : f32
    %15 = vector.broadcast %cst_5 : f32 to vector<16x128xf32>
    %16 = arith.maximumf %14, %15 : vector<16x128xf32>
    %17 = arith.mulf %16, %16 : vector<16x128xf32>
    %18 = arith.mulf %17, %11 : vector<16x128xf32>
    %19 = vector.shape_cast %18 : vector<16x128xf32> to vector<2x8x128xf32>
    %cst_6 = arith.constant dense<0.000000e+00> : vector<8x128xf32>
    %20 = vector.multi_reduction <add>, %19, %cst_6 [0] : vector<2x8x128xf32> to vector<8x128xf32>
    %21 = vector.shape_cast %20 : vector<8x128xf32> to vector<1x8x128xf32>
    %c0_7 = arith.constant 0 : index
    %c0_8 = arith.constant 0 : index
    %c0_9 = arith.constant 0 : index
    %22 = vector.load %arg3[%c0_7, %c0_8, %c0_9] : memref<1x8x128xf32, #tpu.memory_space<vmem>>, vector<1x8x128xf32>
    tpu.vector_store %arg3[%c0_7, %c0_8, %c0_9], %21 {strides = array<i32>} : memref<1x8x128xf32, #tpu.memory_space<vmem>>, vector<1x8x128xf32>,
    return
  }
  func.func @transform_0(%arg0: i32) -> (i32, i32) {
    %c0_i32 = arith.constant 0 : i32
    %c0_i32_0 = arith.constant 0 : i32
    return %arg0, %c0_i32 : i32, i32
  }
  func.func @transform_1(%arg0: i32) -> (i32, i32) {
    %c0_i32 = arith.constant 0 : i32
    %c0_i32_0 = arith.constant 0 : i32
    return %arg0, %c0_i32 : i32, i32
  }
  func.func @transform_2(%arg0: i32) -> (i32, i32, i32) {
    %c0_i32 = arith.constant 0 : i32
    %c0_i32_0 = arith.constant 0 : i32
    %c0_i32_1 = arith.constant 0 : i32
    return %arg0, %c0_i32, %c0_i32_0 : i32, i32, i32
  }
}

</mosaic_0001>

<llo_original>
// kernel: tpu_custom_call.1
$region0: #{tpu_custom_call.1}
  #allocation0 [shape = 'u32[]', space=smem, size = 0x4, offset = 0x4, fixed_abs, tag = 'smem constant byte address 0x4 - core index']
  #allocation1 [shape = 'u32[144,128]{1,0:T(1,128)}', space=vmem, size = 0x12000, scoped, tag = 'internal scratch']
  %s0 = inlined_call_operand.hbm [shape: f32[16,128], index: 0, kind: input, shape index: {}]
  %s1 = inlined_call_operand.hbm [shape: f32[16,128], index: 1, kind: input, shape index: {}]
  %s2 = inlined_call_operand.hbm [shape: f32[1,8,128], index: 2, kind: output, shape index: {}]
  %s3 = sld [smem:[#allocation0]]
  $region26: #{tpu_custom_call.1} parent=0
    _
  %s5 = ssub.s32 1, %s3
  %s6 = scalar_select 0, %s5, %s3
  $region1: #{tpu_custom_call.1} parent=0
    #allocation2 [shape = 'u8[8192]{0}', space=vmem, size = 0x2000, scoped, tag = 'input window, operand 0, single buffered']
    #allocation3 [shape = 's32[1]{0}', space=sflag, size = 0x4, scoped, tag = 'scoped memory for tpu_custom_call.1']
    #allocation4 [shape = 's32[1]{0}', space=sflag, size = 0x4, scoped, tag = 'scoped memory for tpu_custom_call.1']
    #allocation5 [shape = 'u8[8192]{0}', space=vmem, size = 0x2000, scoped, tag = 'input window, operand 1, single buffered']
    #allocation6 [shape = 's32[1]{0}', space=sflag, size = 0x4, scoped, tag = 'scoped memory for tpu_custom_call.1']
    #allocation7 [shape = 'u8[4096]{0}', space=vmem, size = 0x1000, scoped, tag = 'output window, operand 0, single buffered']
    %7 = vsyncpa [#allocation3], 0
    %8 = vsyncpa [#allocation6], 0
    %9 = vsyncpa [#allocation4], 0
    // Predicated region
    $region2: #{tpu_custom_call.1} parent=1 // pred_check
      _
    $region3: #{tpu_custom_call.1} parent=1 // pred_check_branch
      %11 = sbr.rel (0) target = $region5
    $region4: #{tpu_custom_call.1} parent=1 // pred_region
      %s13 = ssub.s32 256, 256
      %14 = vsyncadd [#allocation3], %s13
      %s15 = sshll.u32 [#allocation2], 4
      %s16 = int_to_ptr.vmem [resolvable:$true] %s15
      %21 = dma.hbm_to_vmem [thread:$0]  %s0, 256, %s16, [#allocation3], 128, 128, 8
    $region5: #{tpu_custom_call.1} parent=1 // pred_fallthru
      _
    // Predicated region
    $region6: #{tpu_custom_call.1} parent=1 // pred_check
      _
    $region7: #{tpu_custom_call.1} parent=1 // pred_check_branch
      %23 = sbr.rel (0) target = $region9
    $region8: #{tpu_custom_call.1} parent=1 // pred_region
      %s25 = ssub.s32 256, 256
      %26 = vsyncadd [#allocation6], %s25
      %s27 = sshll.u32 [#allocation5], 4
      %s28 = int_to_ptr.vmem [resolvable:$true] %s27
      %33 = dma.hbm_to_vmem [thread:$0]  %s1, 256, %s28, [#allocation6], 128, 128, 8
    $region9: #{tpu_custom_call.1} parent=1 // pred_fallthru
      _
    // Predicated region
    $region10: #{tpu_custom_call.1} parent=1 // pred_check
      _
    $region11: #{tpu_custom_call.1} parent=1 // pred_check_branch
      %35 = sbr.rel (0) target = $region13
    $region12: #{tpu_custom_call.1} parent=1 // pred_region
      %36 = dma.done [#allocation3], 256
    $region13: #{tpu_custom_call.1} parent=1 // pred_fallthru
      _
    // Predicated region
    $region14: #{tpu_custom_call.1} parent=1 // pred_check
      _
    $region15: #{tpu_custom_call.1} parent=1 // pred_check_branch
      %38 = sbr.rel (0) target = $region17
    $region16: #{tpu_custom_call.1} parent=1 // pred_region
      %39 = dma.done [#allocation6], 256
    $region17: #{tpu_custom_call.1} parent=1 // pred_fallthru
      _
    %v40 = vld [vmem:[#allocation2] sm:$0xff]
    %v41 = vld [vmem:[#allocation2 + $0x8] sm:$0xff]
    %v42 = vld [vmem:[#allocation5] sm:$0xff]
    %v43 = vld [vmem:[#allocation5 + $0x8] sm:$0xff]
    %v44 = vmax.f32 %v40, 0.0
    %v45 = vmax.f32 %v41, 0.0
    %v46 = vand.u32 2147483647, %v40
    %v47 = vand.u32 2147483647, %v41
    %v48 = vsub.f32 0.0, %v46
    %v49 = vsub.f32 0.0, %v47
    %v50 = vmul.f32 %v48, 1.442695
    %v51 = vpow.pop %v50
    %v52 = vmul.f32 %v49, 1.442695
    %v53 = vpow.pop %v52
    %v54 = vadd.f32 %v51, 1.0
    %v55 = vlog2.pop %v54
    %v56 = vmul.f32 %v55, 0.6931472
    %v57 = vmul.f32 -0.5, %v51
    %v58 = vadd.f32 %v57, 1.0
    %v59 = vmul.f32 %v58, %v51
    %v60 = vand.u32 2147483647, %v51
    %vm61 = vcmp.lt.f32.partialorder %v60, 0.0004427343
    %v62 = vsel %vm61, %v59, %v56
    %v63 = vadd.f32 %v53, 1.0
    %v64 = vlog2.pop %v63
    %v65 = vmul.f32 %v64, 0.6931472
    %v66 = vmul.f32 -0.5, %v53
    %v67 = vadd.f32 %v66, 1.0
    %v68 = vmul.f32 %v67, %v53
    %v69 = vand.u32 2147483647, %v53
    %vm70 = vcmp.lt.f32.partialorder %v69, 0.0004427343
    %v71 = vsel %vm70, %v68, %v65
    %v72 = vadd.f32 %v44, %v62
    %v73 = vadd.f32 %v45, %v71
    %v74 = vmul.f32 %v42, %v40
    %v75 = vmul.f32 %v43, %v41
    %v76 = vsub.f32 %v74, %v72
    %v77 = vsub.f32 %v75, %v73
    %v78 = vmul.f32 %v76, 1.442695
    %v79 = vpow.pop %v78
    %v80 = vmul.f32 %v77, 1.442695
    %v81 = vpow.pop %v80
    %v82 = vsub.f32 1.0, %v79
    %v83 = vsub.f32 1.0, %v81
    %v84 = vmax.f32 %v82, 0.0
    %v85 = vmax.f32 %v83, 0.0
    %v86 = vmul.f32 %v84, %v84
    %v87 = vmul.f32 %v85, %v85
    %v88 = vmul.f32 %v86, %v76
    %v89 = vmul.f32 %v87, %v77
    %v90 = vadd.f32 %v88, %v89
    %91 = vst [vmem:[#allocation7] sm:$0xff] %v90
    // Predicated region
    $region18: #{tpu_custom_call.1} parent=1 // pred_check
      _
    $region19: #{tpu_custom_call.1} parent=1 // pred_check_branch
      %93 = sbr.rel (0) target = $region21
    $region20: #{tpu_custom_call.1} parent=1 // pred_region
      %s95 = ssub.s32 128, 128
      %96 = vsyncadd [#allocation4], %s95
      %s98 = sshll.u32 [#allocation7], 4
      %s99 = int_to_ptr.vmem [resolvable:$true] %s98
      %101 = dma.vmem_to_hbm [thread:$0]  %s99, 128, %s2, [#allocation4]
    $region21: #{tpu_custom_call.1} parent=1 // pred_fallthru
      _
    // Predicated region
    $region22: #{tpu_custom_call.1} parent=1 // pred_check
      _
    $region23: #{tpu_custom_call.1} parent=1 // pred_check_branch
      %103 = sbr.rel (0) target = $region25
    $region24: #{tpu_custom_call.1} parent=1 // pred_region
      %104 = dma.done [#allocation4], 128
    $region25: #{tpu_custom_call.1} parent=1 // pred_fallthru
      _
    %105 = vsyncpa [#allocation3], 1
    %106 = vsyncpa [#allocation6], 1
    %107 = vsyncpa [#allocation4], 1

</llo_original>
